<compile_context>
chip_gen: v5e
topology: v5e:2x2
jax: 0.10.0
libtpu: 0.0.40
codegen_flags: <defaults>
</compile_context>

<pallas_src>
import functools

import jax
import jax.numpy as jnp
from jax import lax
from jax.experimental import pallas as pl
from jax.experimental.pallas import tpu as pltpu


_TILE_ELEMS = 8192 * 128    # ~1M elements per input tile (4 MiB of f32 intermediates)
_MIN_SPLIT_ROWS = 4096      # split a single big tile in two so v7x's 2 TCs both get work


@functools.lru_cache(maxsize=None)
def _segment_matmul_precision():
    """3-pass (HIGH) is bit-exact for a 0/1 RHS; probe once, fall back to 6-pass HIGHEST."""
    def probe(x_ref, s_ref, o_ref):
        o_ref[...] = jnp.dot(x_ref[...], s_ref[...],
                             preferred_element_type=jnp.float32,
                             precision=lax.Precision.HIGH)
    try:
        jax.block_until_ready(
            pl.pallas_call(
                probe,
                out_shape=jax.ShapeDtypeStruct((8, 128), jnp.float32),
            )(jnp.ones((8, 128), jnp.float32), jnp.ones((128, 128), jnp.float32)))
        return lax.Precision.HIGH
    except Exception:  # Mosaic without 3-pass lowering: HIGHEST stays bit-exact (just slower).
        return lax.Precision.HIGHEST


def _act_nan_kernel(thres_ref, x_ref, seg_ref, tgt_ref, o_ref, *,
                    tile_rows, valid_rows, mask_last, precision):
    # thres_ref: (1,)  f32 SMEM                 - threshold (runtime scalar, no recompile)
    # x_ref:     (tile_rows, packed_feat) VMEM  - `group` original rows packed per sublane row
    # seg_ref:   (packed_feat, 128) f32 VMEM    - block-diagonal 0/1 segment-sum matrix
    # tgt_ref:   (1, 128) f32 VMEM              - 0.0 in live columns, NaN sentinel elsewhere
    # o_ref:     (1, 128) i32 VMEM              - this tile's per-column partial zero-count
    y = jnp.ceil(x_ref[...].astype(jnp.float32) - thres_ref[0])              # VPU
    sums = jnp.dot(y, seg_ref[...],
                   preferred_element_type=jnp.float32,
                   precision=precision)                                       # MXU (tile_rows,128)
    flags = (sums == tgt_ref[...]).astype(jnp.int32)                          # NaN cols never hit

    if mask_last:
        is_last = pl.program_id(0) == pl.num_programs(0) - 1

        @pl.when(jnp.logical_not(is_last))
        def _():
            o_ref[...] = jnp.sum(flags, axis=0, keepdims=True)

        @pl.when(is_last)
        def _():
            # Only the ragged last block pays for the row-validity mask (covers the
            # unspecified contents of the out-of-bounds tail of the last block read).
            r = lax.broadcasted_iota(jnp.int32, flags.shape, 0)
            valid = pl.program_id(0) * tile_rows + r < valid_rows
            o_ref[...] = jnp.sum(jnp.where(valid, flags, 0), axis=0, keepdims=True)
    else:
        o_ref[...] = jnp.sum(flags, axis=0, keepdims=True)


def act_nan_layer(act_all, thres_act):
    """Pallas equivalent of act_nan_layer.forward; returns a scalar int32 count."""
    act_all = jnp.asarray(act_all)
    if not jnp.issubdtype(act_all.dtype, jnp.floating):
        act_all = act_all.astype(jnp.float32)

    feat = act_all.shape[-1]
    rows = 1
    for d in act_all.shape[:-1]:
        rows *= d

    if rows == 0:
        return jnp.int32(0)
    if feat == 0:
        # Sum over an empty last axis is 0 for every row -> every row counts.
        return jnp.int32(rows)

    thres = jnp.asarray(thres_act, dtype=jnp.float32).reshape((1,))
    x2d = act_all.reshape(rows, feat)

    # Lane packing: fold `group` original rows into one 128-lane packed row when feat | 128.
    group = 128 // feat if (feat <= 128 and 128 % feat == 0) else 1
    main_rows = (rows // group) * group
    leftover = rows - main_rows

    total = jnp.int32(0)

    if main_rows > 0:
        packed_feat = group * feat
        packed_rows = main_rows // group
        # No concat-pad: only slice the divisible prefix (and only in the rare ragged case).
        x_main = x2d if leftover == 0 else x2d[:main_rows]
        xp = x_main.reshape(packed_rows, packed_feat)

        # Element/byte-budgeted tiles (~8192 x 128) amortize per-grid-step overhead and keep
        # the (untiled) feature axis legal in VMEM for any feat.
        # TODO(synk): for extremely wide feat (packed_feat in the hundreds of thousands) a K
        # grid axis with an f32 accumulator would be needed to stay inside VMEM.
        tile_rows = max(8, (_TILE_ELEMS // packed_feat) // 8 * 8)
        if tile_rows >= packed_rows:
            if packed_rows >= _MIN_SPLIT_ROWS:
                # Enough work for 2 grid steps -> both v7x TensorCores get a tile.
                tile_rows = (-(-packed_rows // 2) + 7) // 8 * 8
            else:
                tile_rows = packed_rows
        num_tiles = -(-packed_rows // tile_rows)
        mask_last = (packed_rows % tile_rows) != 0

        # Block-diagonal 0/1 matrix: column g sums the `feat` lanes of packed original row g.
        lane = jnp.arange(packed_feat)[:, None]
        col = jnp.arange(128)[None, :]
        seg = ((col < group) & (lane // feat == col)).astype(jnp.float32)

        # Compare target: 0.0 in the `group` live columns, NaN (never equal) in the dead ones.
        tgt = jnp.where(jnp.arange(128) < group, jnp.float32(0.0),
                        jnp.float32(jnp.nan)).reshape(1, 128)

        itemsize = xp.dtype.itemsize
        vmem_est = (2 * tile_rows * packed_feat * itemsize   # double-buffered input tile
                    + 3 * tile_rows * packed_feat * 4        # y + cast temps
                    + 4 * tile_rows * 128 * 4                # sums / flags / reduce temps
                    + packed_feat * 128 * 4                  # segment matrix
                    + (1 << 20))                             # misc
        vmem_limit = int(min(48 << 20, max(32 << 20, vmem_est)))

        kernel = functools.partial(
            _act_nan_kernel,
            tile_rows=tile_rows,
            valid_rows=packed_rows,
            mask_last=mask_last,
            precision=_segment_matmul_precision(),
        )

        partials = pl.pallas_call(
            kernel,
            out_shape=jax.ShapeDtypeStruct((num_tiles, 128), jnp.int32),
            grid_spec=pltpu.PrefetchScalarGridSpec(
                num_scalar_prefetch=0,
                grid=(num_tiles,),
                in_specs=[
                    pl.BlockSpec(memory_space=pltpu.MemorySpace.SMEM),          # thres scalar
                    pl.BlockSpec((tile_rows, packed_feat), lambda i: (i, 0)),   # packed acts
                    pl.BlockSpec((packed_feat, 128), lambda i: (0, 0)),         # seg matrix
                    pl.BlockSpec((1, 128), lambda i: (0, 0)),                   # compare target
                ],
                out_specs=pl.BlockSpec((1, 128), lambda i: (i, 0)),
            ),
            compiler_params=pltpu.CompilerParams(
                dimension_semantics=("parallel",),   # independent per-tile partials
                vmem_limit_bytes=vmem_limit,
            ),
        )(thres, xp, seg, tgt)

        total = jnp.sum(partials)

    if leftover:
        # < group leftover rows: a few lines of plain jnp instead of a full-tensor concat-pad.
        y_tail = jnp.ceil(x2d[main_rows:].astype(jnp.float32) - thres[0])
        total = total + jnp.sum((jnp.sum(y_tail, axis=-1) == 0.0).astype(jnp.int32))

    return total


def _reference(act_all, thres_act):
    y = jnp.ceil(jnp.asarray(act_all, jnp.float32) - thres_act)
    act = jnp.sum(y, axis=-1)
    return jnp.sum((act == 0.0).astype(jnp.int32))


if __name__ == "__main__":
    key = jax.random.PRNGKey(0)
    thres_act = 0.5

    # Activation tensor whose last axis is reduced: (batch=2, channels=4, spatial=16, feat=16).
    x = jax.random.uniform(key, (2, 4, 16, 16), dtype=jnp.float32)
    # Force some rows entirely below the threshold so the "nan error" count is non-trivial.
    row_mask = (jnp.arange(2 * 4 * 16) % 7 == 0).reshape(2, 4, 16, 1)
    x = jnp.where(row_mask, 0.1, x)

    result = jax.block_until_ready(act_nan_layer(x, thres_act))
    expected = jax.block_until_ready(_reference(x, thres_act))
    assert int(result) == int(expected), (int(result), int(expected))

    # Extra small shapes: group==1 path (feat does not divide 128) and ragged prefix+leftover.
    for shape in [(3, 7, 10), (13, 16)]:
        key, sub = jax.random.split(key)
        xe = jax.random.uniform(sub, shape, dtype=jnp.float32) * 2.0 - 0.75
        r = jax.block_until_ready(act_nan_layer(xe, thres_act))
        e = jax.block_until_ready(_reference(xe, thres_act))
        assert int(r) == int(e), (shape, int(r), int(e))

    print("KERNEL_OK")
</pallas_src>

<mosaic_0001>
module attributes {stable_mosaic.version = 11 : i64} {
  func.func @_act_nan_kernel(%arg0: i32, %arg1: memref<1xf32, #tpu.memory_space<smem>>, %arg2: memref<16x128xf32, #tpu.memory_space<vmem>>, %arg3: memref<128x128xf32, #tpu.memory_space<vmem>>, %arg4: memref<1x128xf32, #tpu.memory_space<vmem>>, %arg5: memref<1x128xi32, #tpu.memory_space<vmem>>) attributes {dimension_semantics = [#tpu.dimension_semantics<parallel>], iteration_bounds = array<i64: 1>, scalar_prefetch = 0 : i64, scratch_operands = 0 : i64, tpu.core_type = #tpu.core_type<tc>, window_params = [{transform_indices = @transform_0, window_bounds = array<i64: 1>}, {transform_indices = @transform_1, window_bounds = array<i64: 16, 128>}, {pipeline_mode = #tpu.pipeline_mode<synchronous>, transform_indices = @transform_2, window_bounds = array<i64: 128, 128>}, {pipeline_mode = #tpu.pipeline_mode<synchronous>, transform_indices = @transform_3, window_bounds = array<i64: 1, 128>}, {transform_indices = @transform_4, window_bounds = array<i64: 1, 128>}]} {
    %c0 = arith.constant 0 : index
    %c0_0 = arith.constant 0 : index
    %0 = vector.load %arg2[%c0, %c0_0] : memref<16x128xf32, #tpu.memory_space<vmem>>, vector<16x128xf32>
    %c0_1 = arith.constant 0 : index
    %1 = memref.load %arg1[%c0_1] : memref<1xf32, #tpu.memory_space<smem>>
    %2 = vector.broadcast %1 : f32 to vector<16x128xf32>
    %3 = arith.subf %0, %2 : vector<16x128xf32>
    %4 = math.ceil %3 : vector<16x128xf32>
    %c0_2 = arith.constant 0 : index
    %c0_3 = arith.constant 0 : index
    %5 = vector.load %arg3[%c0_2, %c0_3] : memref<128x128xf32, #tpu.memory_space<vmem>>, vector<128x128xf32>
    %cst = arith.constant dense<0.000000e+00> : vector<16x128xf32>
    %6 = tpu.matmul %4, %5, %cst {dimension_numbers = #tpu.dot_dimension_numbers<[1], [0], [0], [1], [0, 0, 1, 1], [], []>, precision = #tpu.contract_precision<fp32>} : vector<16x128xf32>, vector<128x128xf32>, vector<16x128xf32> -> vector<16x128xf32>
    %c0_4 = arith.constant 0 : index
    %c0_5 = arith.constant 0 : index
    %7 = vector.load %arg4[%c0_4, %c0_5] : memref<1x128xf32, #tpu.memory_space<vmem>>, vector<1x128xf32>
    %8 = vector.broadcast %7 : vector<1x128xf32> to vector<16x128xf32>
    %9 = arith.cmpf oeq, %6, %8 : vector<16x128xf32>
    %10 = arith.extui %9 : vector<16x128xi1> to vector<16x128xi32>
    %cst_6 = arith.constant dense<0> : vector<128xi32>
    %11 = vector.multi_reduction <add>, %10, %cst_6 [0] : vector<16x128xi32> to vector<128xi32>
    %12 = vector.shape_cast %11 : vector<128xi32> to vector<1x128xi32>
    %c0_7 = arith.constant 0 : index
    %c0_8 = arith.constant 0 : index
    %13 = vector.load %arg5[%c0_7, %c0_8] : memref<1x128xi32, #tpu.memory_space<vmem>>, vector<1x128xi32>
    tpu.vector_store %arg5[%c0_7, %c0_8], %12 {strides = array<i32>} : memref<1x128xi32, #tpu.memory_space<vmem>>, vector<1x128xi32>,
    return
  }
  func.func @transform_0(%arg0: i32) -> i32 {
    %c0_i32 = arith.constant 0 : i32
    %c0_i32_0 = arith.constant 0 : i32
    return %c0_i32 : i32
  }
  func.func @transform_1(%arg0: i32) -> (i32, i32) {
    %c0_i32 = arith.constant 0 : i32
    %c0_i32_0 = arith.constant 0 : i32
    return %arg0, %c0_i32 : i32, i32
  }
  func.func @transform_2(%arg0: i32) -> (i32, i32) {
    %c0_i32 = arith.constant 0 : i32
    %c0_i32_0 = arith.constant 0 : i32
    %c0_i32_1 = arith.constant 0 : i32
    return %c0_i32, %c0_i32_0 : i32, i32
  }
  func.func @transform_3(%arg0: i32) -> (i32, i32) {
    %c0_i32 = arith.constant 0 : i32
    %c0_i32_0 = arith.constant 0 : i32
    %c0_i32_1 = arith.constant 0 : i32
    return %c0_i32, %c0_i32_0 : i32, i32
  }
  func.func @transform_4(%arg0: i32) -> (i32, i32) {
    %c0_i32 = arith.constant 0 : i32
    %c0_i32_0 = arith.constant 0 : i32
    return %arg0, %c0_i32 : i32, i32
  }
}

</mosaic_0001>

<llo_original>
// kernel: tpu_custom_call.1
$region0: #{tpu_custom_call.1}
  #allocation0 [shape = 'u32[]', space=smem, size = 0x4, offset = 0x4, fixed_abs, tag = 'smem constant byte address 0x4 - core index']
  #allocation1 [shape = 'u32[72,128]{1,0:T(1,128)}', space=vmem, size = 0x9000, scoped, tag = 'internal scratch']
  #allocation2 [shape = 'f32[1]{0:T(128)S(6)}', space=smem, size = 0x200, scoped, tag = 'scoped memory for tpu_custom_call.1']
  %s0 = inlined_call_operand.<no memory space> [shape: f32[1], index: 0, kind: input, shape index: {}]
  %s1 = inlined_call_operand.hbm [shape: f32[16,128], index: 1, kind: input, shape index: {}]
  %s2 = inlined_call_operand.hbm [shape: f32[128,128], index: 2, kind: input, shape index: {}]
  %s3 = inlined_call_operand.vmem [shape: f32[1,128], index: 3, kind: input, shape index: {}]
  %s4 = inlined_call_operand.hbm [shape: s32[1,128], index: 4, kind: output, shape index: {}]
  %s5 = sld [smem:[#allocation0]]
  $region34: #{tpu_custom_call.1} parent=0
    _
  %s7 = ssub.s32 1, %s5
  %s8 = scalar_select 0, %s7, %s5
  %9 = sst [smem:[#allocation2]] %s0
  $region1: #{tpu_custom_call.1} parent=0
    #allocation3 [shape = 'u8[8192]{0}', space=vmem, size = 0x2000, scoped, tag = 'input window, operand 1, single buffered']
    #allocation4 [shape = 's32[1]{0}', space=sflag, size = 0x4, scoped, tag = 'scoped memory for tpu_custom_call.1']
    #allocation5 [shape = 's32[1]{0}', space=sflag, size = 0x4, scoped, tag = 'scoped memory for tpu_custom_call.1']
    #allocation6 [shape = 'u8[65536]{0}', space=vmem, size = 0x10000, scoped, tag = 'input window, operand 2, single buffered']
    #allocation7 [shape = 's32[1]{0}', space=sflag, size = 0x4, scoped, tag = 'scoped memory for tpu_custom_call.1']
    #allocation8 [shape = 'u8[512]{0}', space=vmem, size = 0x400, scoped, tag = 'output window, operand 0, single buffered']
    %10 = vsyncpa [#allocation4], 0
    %11 = vsyncpa [#allocation7], 0
    %12 = vsyncpa [#allocation5], 0
    // Predicated region
    $region2: #{tpu_custom_call.1} parent=1 // pred_check
      _
    $region3: #{tpu_custom_call.1} parent=1 // pred_check_branch
      %14 = sbr.rel (0) target = $region5
    $region4: #{tpu_custom_call.1} parent=1 // pred_region
      _
    $region5: #{tpu_custom_call.1} parent=1 // pred_fallthru
      _
    // Predicated region
    $region6: #{tpu_custom_call.1} parent=1 // pred_check
      _
    $region7: #{tpu_custom_call.1} parent=1 // pred_check_branch
      %16 = sbr.rel (0) target = $region9
    $region8: #{tpu_custom_call.1} parent=1 // pred_region
      %18 = vsyncadd [#allocation4], 0
      %s19 = sshll.u32 %s1, 4
      %s20 = int_to_ptr.hbm [resolvable:$true] %s19
      %s21 = sshll.u32 [#allocation3], 4
      %s22 = int_to_ptr.vmem [resolvable:$true] %s21
      %27 = dma.hbm_to_vmem [thread:$0]  %s20, 256, %s22, [#allocation4], 128, 128, 8
    $region9: #{tpu_custom_call.1} parent=1 // pred_fallthru
      _
    // Predicated region
    $region10: #{tpu_custom_call.1} parent=1 // pred_check
      _
    $region11: #{tpu_custom_call.1} parent=1 // pred_check_branch
      %29 = sbr.rel (0) target = $region13
    $region12: #{tpu_custom_call.1} parent=1 // pred_region
      %31 = vsyncadd [#allocation7], 0
      %s32 = sshll.u32 %s2, 4
      %s33 = int_to_ptr.hbm [resolvable:$true] %s32
      %s34 = sshll.u32 [#allocation6], 4
      %s35 = int_to_ptr.vmem [resolvable:$true] %s34
      %40 = dma.hbm_to_vmem [thread:$0]  %s33, 2048, %s35, [#allocation7], 128, 128, 8
    $region13: #{tpu_custom_call.1} parent=1 // pred_fallthru
      _
    // Predicated region
    $region14: #{tpu_custom_call.1} parent=1 // pred_check
      _
    $region15: #{tpu_custom_call.1} parent=1 // pred_check_branch
      %42 = sbr.rel (0) target = $region17
    $region16: #{tpu_custom_call.1} parent=1 // pred_region
      _
    $region17: #{tpu_custom_call.1} parent=1 // pred_fallthru
      _
    // Predicated region
    $region18: #{tpu_custom_call.1} parent=1 // pred_check
      _
    $region19: #{tpu_custom_call.1} parent=1 // pred_check_branch
      %44 = sbr.rel (0) target = $region21
    $region20: #{tpu_custom_call.1} parent=1 // pred_region
      %46 = dma.done [#allocation4], 256
    $region21: #{tpu_custom_call.1} parent=1 // pred_fallthru
      _
    // Predicated region
    $region22: #{tpu_custom_call.1} parent=1 // pred_check
      _
    $region23: #{tpu_custom_call.1} parent=1 // pred_check_branch
      %48 = sbr.rel (0) target = $region25
    $region24: #{tpu_custom_call.1} parent=1 // pred_region
      %50 = dma.done [#allocation7], 2048
    $region25: #{tpu_custom_call.1} parent=1 // pred_fallthru
      _
    %v51 = vld [vmem:[#allocation3] sm:$0xff]
    %v52 = vld [vmem:[#allocation3 + $0x8] sm:$0xff]
    %s53 = sld [smem:[#allocation2]]
    %v54 = vstv %s53
    %v55 = vsub.f32 %v51, %v54
    %v56 = vsub.f32 %v52, %v54
    %v57 = vceil.f32 %v55
    %v58 = vceil.f32 %v56
    %v59 = vld [vmem:[#allocation6] sm:$0xff]
    %v60 = vld [vmem:[#allocation6 + $0x8] sm:$0xff]
    %v61 = vld [vmem:[#allocation6 + $0x10] sm:$0xff]
    %v62 = vld [vmem:[#allocation6 + $0x18] sm:$0xff]
    %v63 = vld [vmem:[#allocation6 + $0x20] sm:$0xff]
    %v64 = vld [vmem:[#allocation6 + $0x28] sm:$0xff]
    %v65 = vld [vmem:[#allocation6 + $0x30] sm:$0xff]
    %v66 = vld [vmem:[#allocation6 + $0x38] sm:$0xff]
    %v67 = vld [vmem:[#allocation6 + $0x40] sm:$0xff]
    %v68 = vld [vmem:[#allocation6 + $0x48] sm:$0xff]
    %v69 = vld [vmem:[#allocation6 + $0x50] sm:$0xff]
    %v70 = vld [vmem:[#allocation6 + $0x58] sm:$0xff]
    %v71 = vld [vmem:[#allocation6 + $0x60] sm:$0xff]
    %v72 = vld [vmem:[#allocation6 + $0x68] sm:$0xff]
    %v73 = vld [vmem:[#allocation6 + $0x70] sm:$0xff]
    %v74 = vld [vmem:[#allocation6 + $0x78] sm:$0xff]
    %v75 = vand.u32 %v74, 4294901760
    %76 = vmatpush.msra.mxu0 %v75
    %v77 = vand.u32 %v73, 4294901760
    %78 = vmatpush.msra.mxu0 %v77
    %v79 = vand.u32 %v72, 4294901760
    %80 = vmatpush.msra.mxu0 %v79
    %v81 = vand.u32 %v71, 4294901760
    %82 = vmatpush.msra.mxu0 %v81
    %v83 = vand.u32 %v70, 4294901760
    %84 = vmatpush.msra.mxu0 %v83
    %v85 = vand.u32 %v69, 4294901760
    %86 = vmatpush.msra.mxu0 %v85
    %v87 = vand.u32 %v68, 4294901760
    %88 = vmatpush.msra.mxu0 %v87
    %v89 = vand.u32 %v67, 4294901760
    %90 = vmatpush.msra.mxu0 %v89
    %v91 = vand.u32 %v66, 4294901760
    %92 = vmatpush.msra.mxu0 %v91
    %v93 = vand.u32 %v65, 4294901760
    %94 = vmatpush.msra.mxu0 %v93
    %v95 = vand.u32 %v64, 4294901760
    %96 = vmatpush.msra.mxu0 %v95
    %v97 = vand.u32 %v63, 4294901760
    %98 = vmatpush.msra.mxu0 %v97
    %v99 = vand.u32 %v62, 4294901760
    %100 = vmatpush.msra.mxu0 %v99
    %v101 = vand.u32 %v61, 4294901760
    %102 = vmatpush.msra.mxu0 %v101
    %v103 = vand.u32 %v60, 4294901760
    %104 = vmatpush.msra.mxu0 %v103
    %v105 = vand.u32 %v59, 4294901760
    %106 = vmatpush.msra.mxu0 %v105
    %v107 = vand.u32 %v57, 4294901760
    %v108 = vsub.f32 %v57, %v107
    %v109 = vand.u32 %v108, 4294901760
    %v110 = vsub.f32 %v108, %v109
    %v111 = vand.u32 %v110, 4294901760
    %112 = vmatmul.f32.gmra.mxu0 %v111
    %v113 = vpop.f32.mrf.mxu0
    %v114 = vadd.f32 0.0, %v113
    %v115 = vand.u32 %v58, 4294901760
    %v116 = vsub.f32 %v58, %v115
    %v117 = vand.u32 %v116, 4294901760
    %v118 = vsub.f32 %v116, %v117
    %v119 = vand.u32 %v118, 4294901760
    %120 = vmatmul.f32.gmra.mxu0 %v119
    %v121 = vpop.f32.mrf.mxu0
    %v122 = vadd.f32 0.0, %v121
    %123 = vdwg.mxu0
    %v124 = vand.u32 %v74, 4294901760
    %v125 = vsub.f32 %v74, %v124
    %v126 = vand.u32 %v125, 4294901760
    %v127 = vsub.f32 %v125, %v126
    %v128 = vand.u32 %v127, 4294901760
    %129 = vmatpush.msra.mxu0 %v128
    %v130 = vand.u32 %v73, 4294901760
    %v131 = vsub.f32 %v73, %v130
    %v132 = vand.u32 %v131, 4294901760
    %v133 = vsub.f32 %v131, %v132
    %v134 = vand.u32 %v133, 4294901760
    %135 = vmatpush.msra.mxu0 %v134
    %v136 = vand.u32 %v72, 4294901760
    %v137 = vsub.f32 %v72, %v136
    %v138 = vand.u32 %v137, 4294901760
    %v139 = vsub.f32 %v137, %v138
    %v140 = vand.u32 %v139, 4294901760
    %141 = vmatpush.msra.mxu0 %v140
    %v142 = vand.u32 %v71, 4294901760
    %v143 = vsub.f32 %v71, %v142
    %v144 = vand.u32 %v143, 4294901760
    %v145 = vsub.f32 %v143, %v144
    %v146 = vand.u32 %v145, 4294901760
    %147 = vmatpush.msra.mxu0 %v146
    %v148 = vand.u32 %v70, 4294901760
    %v149 = vsub.f32 %v70, %v148
    %v150 = vand.u32 %v149, 4294901760
    %v151 = vsub.f32 %v149, %v150
    %v152 = vand.u32 %v151, 4294901760
    %153 = vmatpush.msra.mxu0 %v152
    %v154 = vand.u32 %v69, 4294901760
    %v155 = vsub.f32 %v69, %v154
    %v156 = vand.u32 %v155, 4294901760
    %v157 = vsub.f32 %v155, %v156
    %v158 = vand.u32 %v157, 4294901760
    %159 = vmatpush.msra.mxu0 %v158
    %v160 = vand.u32 %v68, 4294901760
    %v161 = vsub.f32 %v68, %v160
    %v162 = vand.u32 %v161, 4294901760
    %v163 = vsub.f32 %v161, %v162
    %v164 = vand.u32 %v163, 4294901760
    %165 = vmatpush.msra.mxu0 %v164
    %v166 = vand.u32 %v67, 4294901760
    %v167 = vsub.f32 %v67, %v166
    %v168 = vand.u32 %v167, 4294901760
    %v169 = vsub.f32 %v167, %v168
    %v170 = vand.u32 %v169, 4294901760
    %171 = vmatpush.msra.mxu0 %v170
    %v172 = vand.u32 %v66, 4294901760
    %v173 = vsub.f32 %v66, %v172
    %v174 = vand.u32 %v173, 4294901760
    %v175 = vsub.f32 %v173, %v174
    %v176 = vand.u32 %v175, 4294901760
    %177 = vmatpush.msra.mxu0 %v176
    %v178 = vand.u32 %v65, 4294901760
    %v179 = vsub.f32 %v65, %v178
    %v180 = vand.u32 %v179, 4294901760
    %v181 = vsub.f32 %v179, %v180
    %v182 = vand.u32 %v181, 4294901760
    %183 = vmatpush.msra.mxu0 %v182
    %v184 = vand.u32 %v64, 4294901760
    %v185 = vsub.f32 %v64, %v184
    %v186 = vand.u32 %v185, 4294901760
    %v187 = vsub.f32 %v185, %v186
    %v188 = vand.u32 %v187, 4294901760
    %189 = vmatpush.msra.mxu0 %v188
    %v190 = vand.u32 %v63, 4294901760
    %v191 = vsub.f32 %v63, %v190
    %v192 = vand.u32 %v191, 4294901760
    %v193 = vsub.f32 %v191, %v192
    %v194 = vand.u32 %v193, 4294901760
    %195 = vmatpush.msra.mxu0 %v194
    %v196 = vand.u32 %v62, 4294901760
    %v197 = vsub.f32 %v62, %v196
    %v198 = vand.u32 %v197, 4294901760
    %v199 = vsub.f32 %v197, %v198
    %v200 = vand.u32 %v199, 4294901760
    %201 = vmatpush.msra.mxu0 %v200
    %v202 = vand.u32 %v61, 4294901760
    %v203 = vsub.f32 %v61, %v202
    %v204 = vand.u32 %v203, 4294901760
    %v205 = vsub.f32 %v203, %v204
    %v206 = vand.u32 %v205, 4294901760
    %207 = vmatpush.msra.mxu0 %v206
    %v208 = vand.u32 %v60, 4294901760
    %v209 = vsub.f32 %v60, %v208
    %v210 = vand.u32 %v209, 4294901760
    %v211 = vsub.f32 %v209, %v210
    %v212 = vand.u32 %v211, 4294901760
    %213 = vmatpush.msra.mxu0 %v212
    %v214 = vand.u32 %v59, 4294901760
    %v215 = vsub.f32 %v59, %v214
    %v216 = vand.u32 %v215, 4294901760
    %v217 = vsub.f32 %v215, %v216
    %v218 = vand.u32 %v217, 4294901760
    %219 = vmatpush.msra.mxu0 %v218
    %v220 = vand.u32 %v57, 4294901760
    %221 = vmatmul.f32.gmra.mxu0 %v220
    %v222 = vpop.f32.mrf.mxu0
    %v223 = vadd.f32 %v114, %v222
    %v224 = vand.u32 %v58, 4294901760
    %225 = vmatmul.f32.gmra.mxu0 %v224
    %v226 = vpop.f32.mrf.mxu0
    %v227 = vadd.f32 %v122, %v226
    %228 = vdwg.mxu0
    %v229 = vand.u32 %v74, 4294901760
    %v230 = vsub.f32 %v74, %v229
    %231 = vmatpush.msra.mxu0 %v230
    %v232 = vand.u32 %v73, 4294901760
    %v233 = vsub.f32 %v73, %v232
    %234 = vmatpush.msra.mxu0 %v233
    %v235 = vand.u32 %v72, 4294901760
    %v236 = vsub.f32 %v72, %v235
    %237 = vmatpush.msra.mxu0 %v236
    %v238 = vand.u32 %v71, 4294901760
    %v239 = vsub.f32 %v71, %v238
    %240 = vmatpush.msra.mxu0 %v239
    %v241 = vand.u32 %v70, 4294901760
    %v242 = vsub.f32 %v70, %v241
    %243 = vmatpush.msra.mxu0 %v242
    %v244 = vand.u32 %v69, 4294901760
    %v245 = vsub.f32 %v69, %v244
    %246 = vmatpush.msra.mxu0 %v245
    %v247 = vand.u32 %v68, 4294901760
    %v248 = vsub.f32 %v68, %v247
    %249 = vmatpush.msra.mxu0 %v248
    %v250 = vand.u32 %v67, 4294901760
    %v251 = vsub.f32 %v67, %v250
    %252 = vmatpush.msra.mxu0 %v251
    %v253 = vand.u32 %v66, 4294901760
    %v254 = vsub.f32 %v66, %v253
    %255 = vmatpush.msra.mxu0 %v254
    %v256 = vand.u32 %v65, 4294901760
    %v257 = vsub.f32 %v65, %v256
    %258 = vmatpush.msra.mxu0 %v257
    %v259 = vand.u32 %v64, 4294901760
    %v260 = vsub.f32 %v64, %v259
    %261 = vmatpush.msra.mxu0 %v260
    %v262 = vand.u32 %v63, 4294901760
    %v263 = vsub.f32 %v63, %v262
    %264 = vmatpush.msra.mxu0 %v263
    %v265 = vand.u32 %v62, 4294901760
    %v266 = vsub.f32 %v62, %v265
    %267 = vmatpush.msra.mxu0 %v266
    %v268 = vand.u32 %v61, 4294901760
    %v269 = vsub.f32 %v61, %v268
    %270 = vmatpush.msra.mxu0 %v269
    %v271 = vand.u32 %v60, 4294901760
    %v272 = vsub.f32 %v60, %v271
    %273 = vmatpush.msra.mxu0 %v272
    %v274 = vand.u32 %v59, 4294901760
    %v275 = vsub.f32 %v59, %v274
    %276 = vmatpush.msra.mxu0 %v275
    %v277 = vand.u32 %v57, 4294901760
    %v278 = vsub.f32 %v57, %v277
    %279 = vmatmul.f32.gmra.mxu0 %v278
    %v280 = vpop.f32.mrf.mxu0
    %v281 = vadd.f32 %v223, %v280
    %v282 = vand.u32 %v58, 4294901760
    %v283 = vsub.f32 %v58, %v282
    %284 = vmatmul.f32.gmra.mxu0 %v283
    %v285 = vpop.f32.mrf.mxu0
    %v286 = vadd.f32 %v227, %v285
    %287 = vdwg.mxu0
    %v288 = vand.u32 %v74, 4294901760
    %289 = vmatpush.msra.mxu0 %v288
    %v290 = vand.u32 %v73, 4294901760
    %291 = vmatpush.msra.mxu0 %v290
    %v292 = vand.u32 %v72, 4294901760
    %293 = vmatpush.msra.mxu0 %v292
    %v294 = vand.u32 %v71, 4294901760
    %295 = vmatpush.msra.mxu0 %v294
    %v296 = vand.u32 %v70, 4294901760
    %297 = vmatpush.msra.mxu0 %v296
    %v298 = vand.u32 %v69, 4294901760
    %299 = vmatpush.msra.mxu0 %v298
    %v300 = vand.u32 %v68, 4294901760
    %301 = vmatpush.msra.mxu0 %v300
    %v302 = vand.u32 %v67, 4294901760
    %303 = vmatpush.msra.mxu0 %v302
    %v304 = vand.u32 %v66, 4294901760
    %305 = vmatpush.msra.mxu0 %v304
    %v306 = vand.u32 %v65, 4294901760
    %307 = vmatpush.msra.mxu0 %v306
    %v308 = vand.u32 %v64, 4294901760
    %309 = vmatpush.msra.mxu0 %v308
    %v310 = vand.u32 %v63, 4294901760
    %311 = vmatpush.msra.mxu0 %v310
    %v312 = vand.u32 %v62, 4294901760
    %313 = vmatpush.msra.mxu0 %v312
    %v314 = vand.u32 %v61, 4294901760
    %315 = vmatpush.msra.mxu0 %v314
    %v316 = vand.u32 %v60, 4294901760
    %317 = vmatpush.msra.mxu0 %v316
    %v318 = vand.u32 %v59, 4294901760
    %319 = vmatpush.msra.mxu0 %v318
    %v320 = vand.u32 %v57, 4294901760
    %v321 = vsub.f32 %v57, %v320
    %v322 = vand.u32 %v321, 4294901760
    %323 = vmatmul.f32.gmra.mxu0 %v322
    %v324 = vpop.f32.mrf.mxu0
    %v325 = vadd.f32 %v281, %v324
    %v326 = vand.u32 %v58, 4294901760
    %v327 = vsub.f32 %v58, %v326
    %v328 = vand.u32 %v327, 4294901760
    %329 = vmatmul.f32.gmra.mxu0 %v328
    %v330 = vpop.f32.mrf.mxu0
    %v331 = vadd.f32 %v286, %v330
    %332 = vdwg.mxu0
    %v333 = vand.u32 %v74, 4294901760
    %v334 = vsub.f32 %v74, %v333
    %v335 = vand.u32 %v334, 4294901760
    %336 = vmatpush.msra.mxu0 %v335
    %v337 = vand.u32 %v73, 4294901760
    %v338 = vsub.f32 %v73, %v337
    %v339 = vand.u32 %v338, 4294901760
    %340 = vmatpush.msra.mxu0 %v339
    %v341 = vand.u32 %v72, 4294901760
    %v342 = vsub.f32 %v72, %v341
    %v343 = vand.u32 %v342, 4294901760
    %344 = vmatpush.msra.mxu0 %v343
    %v345 = vand.u32 %v71, 4294901760
    %v346 = vsub.f32 %v71, %v345
    %v347 = vand.u32 %v346, 4294901760
    %348 = vmatpush.msra.mxu0 %v347
    %v349 = vand.u32 %v70, 4294901760
    %v350 = vsub.f32 %v70, %v349
    %v351 = vand.u32 %v350, 4294901760
    %352 = vmatpush.msra.mxu0 %v351
    %v353 = vand.u32 %v69, 4294901760
    %v354 = vsub.f32 %v69, %v353
    %v355 = vand.u32 %v354, 4294901760
    %356 = vmatpush.msra.mxu0 %v355
    %v357 = vand.u32 %v68, 4294901760
    %v358 = vsub.f32 %v68, %v357
    %v359 = vand.u32 %v358, 4294901760
    %360 = vmatpush.msra.mxu0 %v359
    %v361 = vand.u32 %v67, 4294901760
    %v362 = vsub.f32 %v67, %v361
    %v363 = vand.u32 %v362, 4294901760
    %364 = vmatpush.msra.mxu0 %v363
    %v365 = vand.u32 %v66, 4294901760
    %v366 = vsub.f32 %v66, %v365
    %v367 = vand.u32 %v366, 4294901760
    %368 = vmatpush.msra.mxu0 %v367
    %v369 = vand.u32 %v65, 4294901760
    %v370 = vsub.f32 %v65, %v369
    %v371 = vand.u32 %v370, 4294901760
    %372 = vmatpush.msra.mxu0 %v371
    %v373 = vand.u32 %v64, 4294901760
    %v374 = vsub.f32 %v64, %v373
    %v375 = vand.u32 %v374, 4294901760
    %376 = vmatpush.msra.mxu0 %v375
    %v377 = vand.u32 %v63, 4294901760
    %v378 = vsub.f32 %v63, %v377
    %v379 = vand.u32 %v378, 4294901760
    %380 = vmatpush.msra.mxu0 %v379
    %v381 = vand.u32 %v62, 4294901760
    %v382 = vsub.f32 %v62, %v381
    %v383 = vand.u32 %v382, 4294901760
    %384 = vmatpush.msra.mxu0 %v383
    %v385 = vand.u32 %v61, 4294901760
    %v386 = vsub.f32 %v61, %v385
    %v387 = vand.u32 %v386, 4294901760
    %388 = vmatpush.msra.mxu0 %v387
    %v389 = vand.u32 %v60, 4294901760
    %v390 = vsub.f32 %v60, %v389
    %v391 = vand.u32 %v390, 4294901760
    %392 = vmatpush.msra.mxu0 %v391
    %v393 = vand.u32 %v59, 4294901760
    %v394 = vsub.f32 %v59, %v393
    %v395 = vand.u32 %v394, 4294901760
    %396 = vmatpush.msra.mxu0 %v395
    %v397 = vand.u32 %v57, 4294901760
    %398 = vmatmul.f32.gmra.mxu0 %v397
    %v399 = vpop.f32.mrf.mxu0
    %v400 = vadd.f32 %v325, %v399
    %v401 = vand.u32 %v58, 4294901760
    %402 = vmatmul.f32.gmra.mxu0 %v401
    %v403 = vpop.f32.mrf.mxu0
    %v404 = vadd.f32 %v331, %v403
    %405 = vdwg.mxu0
    %v406 = vand.u32 %v74, 4294901760
    %407 = vmatpush.msra.mxu0 %v406
    %v408 = vand.u32 %v73, 4294901760
    %409 = vmatpush.msra.mxu0 %v408
    %v410 = vand.u32 %v72, 4294901760
    %411 = vmatpush.msra.mxu0 %v410
    %v412 = vand.u32 %v71, 4294901760
    %413 = vmatpush.msra.mxu0 %v412
    %v414 = vand.u32 %v70, 4294901760
    %415 = vmatpush.msra.mxu0 %v414
    %v416 = vand.u32 %v69, 4294901760
    %417 = vmatpush.msra.mxu0 %v416
    %v418 = vand.u32 %v68, 4294901760
    %419 = vmatpush.msra.mxu0 %v418
    %v420 = vand.u32 %v67, 4294901760
    %421 = vmatpush.msra.mxu0 %v420
    %v422 = vand.u32 %v66, 4294901760
    %423 = vmatpush.msra.mxu0 %v422
    %v424 = vand.u32 %v65, 4294901760
    %425 = vmatpush.msra.mxu0 %v424
    %v426 = vand.u32 %v64, 4294901760
    %427 = vmatpush.msra.mxu0 %v426
    %v428 = vand.u32 %v63, 4294901760
    %429 = vmatpush.msra.mxu0 %v428
    %v430 = vand.u32 %v62, 4294901760
    %431 = vmatpush.msra.mxu0 %v430
    %v432 = vand.u32 %v61, 4294901760
    %433 = vmatpush.msra.mxu0 %v432
    %v434 = vand.u32 %v60, 4294901760
    %435 = vmatpush.msra.mxu0 %v434
    %v436 = vand.u32 %v59, 4294901760
    %437 = vmatpush.msra.mxu0 %v436
    %v438 = vand.u32 %v57, 4294901760
    %439 = vmatmul.f32.gmra.mxu0 %v438
    %v440 = vpop.f32.mrf.mxu0
    %v441 = vadd.f32 %v400, %v440
    %v442 = vand.u32 %v58, 4294901760
    %443 = vmatmul.f32.gmra.mxu0 %v442
    %v444 = vpop.f32.mrf.mxu0
    %v445 = vadd.f32 %v404, %v444
    %446 = vdwg.mxu0
    %v447 = vld [vmem:[%s3] sm:$0x1]
    %v449 = vperm.slane %v447, 0
    %vm451 = vcmp.eq.f32.partialorder %v441, %v449
    %vm452 = vcmp.eq.f32.partialorder %v445, %v449
    %v453 = vsel %vm451, 1, 0
    %v454 = vsel %vm452, 1, 0
    %v455 = vadd.s32 %v453, %v454
    %v456 = vrot.slane %v455, 4
    %v457 = vadd.s32 %v455, %v456
    %v458 = vrot.slane %v457, 2
    %v459 = vadd.s32 %v457, %v458
    %v460 = vrot.slane %v459, 1
    %v461 = vadd.s32 %v459, %v460
    %462 = vst [vmem:[#allocation8] sm:$0x1] %v461
    // Predicated region
    $region26: #{tpu_custom_call.1} parent=1 // pred_check
      _
    $region27: #{tpu_custom_call.1} parent=1 // pred_check_branch
      %464 = sbr.rel (0) target = $region29
    $region28: #{tpu_custom_call.1} parent=1 // pred_region
      %466 = vsyncadd [#allocation5], 0
      %s468 = sshll.u32 [#allocation8], 4
      %s469 = int_to_ptr.vmem [resolvable:$true] %s468
      %s470 = sshll.u32 %s4, 4
      %s471 = int_to_ptr.hbm [resolvable:$true] %s470
      %473 = dma.vmem_to_hbm [thread:$0]  %s469, 16, %s471, [#allocation5]
    $region29: #{tpu_custom_call.1} parent=1 // pred_fallthru
      _
    // Predicated region
    $region30: #{tpu_custom_call.1} parent=1 // pred_check
      _
    $region31: #{tpu_custom_call.1} parent=1 // pred_check_branch
      %475 = sbr.rel (0) target = $region33
    $region32: #{tpu_custom_call.1} parent=1 // pred_region
      %477 = dma.done [#allocation5], 16
    $region33: #{tpu_custom_call.1} parent=1 // pred_fallthru
      _
    %478 = vsyncpa [#allocation4], 1
    %479 = vsyncpa [#allocation7], 1
    %480 = vsyncpa [#allocation5], 1

</llo_original>
